<compile_context>
chip_gen: v5e
topology: v5e:2x2
jax: 0.10.0
libtpu: 0.0.40
codegen_flags: <defaults>
</compile_context>

<pallas_src>
import functools

import jax
import jax.numpy as jnp
from jax.experimental import pallas as pl
from jax.experimental.pallas import tpu as pltpu


def _threenet_kernel(x_ref, wbs_ref, bbs_ref, wc_ref, bc_ref, slab_ref, *, O):
    """One batch tile. Output slab layout: [ out(O) | base(O) | pre_phi(D) | phi(D) | S(D) ]."""
    x = x_ref[...]                                    # (TB, D) f32
    x_bf = x.astype(jnp.bfloat16)

    # Fused baseline+switch matmul: one MXU pass produces [base | pre_phi].
    fused = jnp.dot(x_bf, wbs_ref[...], preferred_element_type=jnp.float32)
    fused = fused + bbs_ref[...]                      # (TB, O+D) f32
    pre_phi = fused[:, O:]

    # phi = softplus(pre_phi), numerically stable form (f32).
    phi = jnp.maximum(pre_phi, 0.0) + jnp.log1p(jnp.exp(-jnp.abs(pre_phi)))

    # S = phi / rowsum(phi); reciprocal pushed to EUP slot.
    denom = jnp.sum(phi, axis=1, keepdims=True)
    inv = pl.reciprocal(denom, approx=True)
    S = phi * inv

    # classifier_net(x * S)
    gated = (x * S).astype(jnp.bfloat16)
    out = jnp.dot(gated, wc_ref[...], preferred_element_type=jnp.float32) + bc_ref[...]

    # Single lane-dense store: [out | base | pre_phi | phi | S]
    slab_ref[...] = jnp.concatenate([out, fused, phi, S], axis=1)

    # TODO(synk): the PyTorch NaN-warning print on phi has no in-kernel
    # equivalent; do a host-side jnp.isnan check on the returned phi if needed.


def _choose_tile_b(B):
    # 512-row tiles hit ~85% of HBM roofline; round up to sublane multiple of 8.
    tile = min(512, B)
    return max(8, ((tile + 7) // 8) * 8)


@functools.partial(jax.jit, static_argnames=("tile_b",))
def threenet_forward(x, wb, bb, ws, bs, wc, bc, *, tile_b=None):
    B, D = x.shape
    O = wb.shape[1]
    slab_w = 2 * O + 3 * D

    # Fuse baseline + switch weights into one [D, O+D] bf16 operand.
    w_bs = jnp.concatenate([wb, ws], axis=1).astype(jnp.bfloat16)
    b_bs = jnp.concatenate([bb, bs], axis=1).astype(jnp.float32)
    wc_bf = wc.astype(jnp.bfloat16)
    bc_f = bc.astype(jnp.float32)

    if tile_b is None:
        tile_b = _choose_tile_b(B)
    B_pad = ((B + tile_b - 1) // tile_b) * tile_b
    x_pad = x if B_pad == B else jnp.pad(x, ((0, B_pad - B), (0, 0)))
    grid = (B_pad // tile_b,)

    cost = pl.CostEstimate(
        flops=2 * B_pad * D * (O + D) + 2 * B_pad * D * O,
        transcendentals=3 * B_pad * D,
        bytes_accessed=(x_pad.size * 4 + w_bs.size * 2 + wc_bf.size * 2
                        + b_bs.size * 4 + bc_f.size * 4 + B_pad * slab_w * 4),
    )

    slab = pl.pallas_call(
        functools.partial(_threenet_kernel, O=O),
        out_shape=jax.ShapeDtypeStruct((B_pad, slab_w), jnp.float32),
        grid=grid,
        in_specs=[
            pl.BlockSpec((tile_b, D), lambda i: (i, 0)),   # x tile (pipelined)
            pl.BlockSpec((D, O + D), lambda i: (0, 0)),    # fused [Wb|Ws], VMEM-resident
            pl.BlockSpec((1, O + D), lambda i: (0, 0)),    # fused bias
            pl.BlockSpec((D, O), lambda i: (0, 0)),        # Wc, VMEM-resident
            pl.BlockSpec((1, O), lambda i: (0, 0)),        # bc
        ],
        out_specs=pl.BlockSpec((tile_b, slab_w), lambda i: (i, 0)),
        compiler_params=pltpu.CompilerParams(
            dimension_semantics=("parallel",),             # shard batch across TCs on v7x
            vmem_limit_bytes=48 * 1024 * 1024,             # safe on v5e/v6e (128 MiB) and v7x (64 MiB)
        ),
        cost_estimate=cost,
    )(x_pad, w_bs, b_bs, wc_bf, bc_f)

    slab = slab[:B]
    out = slab[:, :O]
    base = slab[:, O:2 * O]
    pre_phi = slab[:, 2 * O:2 * O + D]
    phi = slab[:, 2 * O + D:2 * O + 2 * D]
    S = slab[:, 2 * O + 2 * D:]
    return out, phi, S, pre_phi, base


def _reference(x, wb, bb, ws, bs, wc, bc):
    base = x @ wb + bb
    pre_phi = x @ ws + bs
    phi = jax.nn.softplus(pre_phi)
    S = phi / jnp.sum(phi, axis=1, keepdims=True)
    out = (x * S) @ wc + bc
    return out, phi, S, pre_phi, base


def _init_linear(kw, kb, fan_in, fan_out):
    # PyTorch-nn.Linear-like uniform(-1/sqrt(fan_in), 1/sqrt(fan_in)); stored [in, out].
    bound = 1.0 / jnp.sqrt(jnp.float32(fan_in))
    w = jax.random.uniform(kw, (fan_in, fan_out), jnp.float32, -bound, bound)
    b = jax.random.uniform(kb, (1, fan_out), jnp.float32, -bound, bound)
    return w, b


def _check(outs, refs, atol=3e-2, rtol=3e-2):
    for got, want in zip(outs, refs):
        assert got.shape == want.shape, (got.shape, want.shape)
        assert jnp.allclose(got, want, atol=atol, rtol=rtol), "mismatch vs reference"


if __name__ == "__main__":
    D = 32   # input_num
    O = 16   # output_num

    key = jax.random.PRNGKey(0)
    kx, kwb, kbb, kws, kbs, kwc, kbc, kx2 = jax.random.split(key, 8)

    wb, bb = _init_linear(kwb, kbb, D, O)   # baseline_net
    ws, bs = _init_linear(kws, kbs, D, D)   # switch_net
    wc, bc = _init_linear(kwc, kbc, D, O)   # classifier_net

    # Primary small case (mini_batch_size = 8): single grid step.
    x = jax.random.normal(kx, (8, D), dtype=jnp.float32)
    outs = jax.block_until_ready(threenet_forward(x, wb, bb, ws, bs, wc, bc))
    _check(outs, _reference(x, wb, bb, ws, bs, wc, bc))

    # Secondary case exercising the batch grid + padding (B=50, tile_b=16 -> 4 steps).
    x2 = jax.random.normal(kx2, (50, D), dtype=jnp.float32)
    outs2 = jax.block_until_ready(
        threenet_forward(x2, wb, bb, ws, bs, wc, bc, tile_b=16))
    _check(outs2, _reference(x2, wb, bb, ws, bs, wc, bc))

    print("KERNEL_OK")
</pallas_src>

<mosaic_0001>
module attributes {stable_mosaic.version = 11 : i64} {
  func.func @_threenet_kernel(%arg0: i32, %arg1: memref<8x32xf32, #tpu.memory_space<vmem>>, %arg2: memref<32x48xbf16, #tpu.memory_space<vmem>>, %arg3: memref<1x48xf32, #tpu.memory_space<vmem>>, %arg4: memref<32x16xbf16, #tpu.memory_space<vmem>>, %arg5: memref<1x16xf32, #tpu.memory_space<vmem>>, %arg6: memref<8x128xf32, #tpu.memory_space<vmem>>) attributes {dimension_semantics = [#tpu.dimension_semantics<parallel>], iteration_bounds = array<i64: 1>, scalar_prefetch = 0 : i64, scratch_operands = 0 : i64, tpu.core_type = #tpu.core_type<tc>, window_params = [{transform_indices = @transform_0, window_bounds = array<i64: 8, 32>}, {pipeline_mode = #tpu.pipeline_mode<synchronous>, transform_indices = @transform_1, window_bounds = array<i64: 32, 48>}, {pipeline_mode = #tpu.pipeline_mode<synchronous>, transform_indices = @transform_2, window_bounds = array<i64: 1, 48>}, {pipeline_mode = #tpu.pipeline_mode<synchronous>, transform_indices = @transform_3, window_bounds = array<i64: 32, 16>}, {pipeline_mode = #tpu.pipeline_mode<synchronous>, transform_indices = @transform_4, window_bounds = array<i64: 1, 16>}, {transform_indices = @transform_5, window_bounds = array<i64: 8, 128>}]} {
    %c0 = arith.constant 0 : index
    %c0_0 = arith.constant 0 : index
    %0 = vector.load %arg1[%c0, %c0_0] : memref<8x32xf32, #tpu.memory_space<vmem>>, vector<8x32xf32>
    %1 = arith.truncf %0 : vector<8x32xf32> to vector<8x32xbf16>
    %c0_1 = arith.constant 0 : index
    %c0_2 = arith.constant 0 : index
    %2 = vector.load %arg2[%c0_1, %c0_2] : memref<32x48xbf16, #tpu.memory_space<vmem>>, vector<32x48xbf16>
    %cst = arith.constant dense<0.000000e+00> : vector<8x48xf32>
    %3 = tpu.matmul %1, %2, %cst {dimension_numbers = #tpu.dot_dimension_numbers<[1], [0], [0], [1], [0, 0, 1, 1], [], []>} : vector<8x32xbf16>, vector<32x48xbf16>, vector<8x48xf32> -> vector<8x48xf32>
    %c0_3 = arith.constant 0 : index
    %c0_4 = arith.constant 0 : index
    %4 = vector.load %arg3[%c0_3, %c0_4] : memref<1x48xf32, #tpu.memory_space<vmem>>, vector<1x48xf32>
    %5 = vector.broadcast %4 : vector<1x48xf32> to vector<8x48xf32>
    %6 = arith.addf %3, %5 : vector<8x48xf32>
    %7 = vector.extract_strided_slice %6 {offsets = [0, 16], sizes = [8, 32], strides = [1, 1]} : vector<8x48xf32> to vector<8x32xf32>
    %cst_5 = arith.constant 0.000000e+00 : f32
    %8 = vector.broadcast %cst_5 : f32 to vector<8x32xf32>
    %9 = arith.maximumf %7, %8 : vector<8x32xf32>
    %10 = math.absf %7 : vector<8x32xf32>
    %cst_6 = arith.constant 0.000000e+00 : f32
    %11 = vector.broadcast %cst_6 : f32 to vector<8x32xf32>
    %12 = arith.subf %11, %10 : vector<8x32xf32>
    %13 = math.exp %12 : vector<8x32xf32>
    %14 = math.log1p %13 : vector<8x32xf32>
    %15 = arith.addf %9, %14 : vector<8x32xf32>
    %cst_7 = arith.constant dense<0.000000e+00> : vector<8xf32>
    %16 = vector.multi_reduction <add>, %15, %cst_7 [1] : vector<8x32xf32> to vector<8xf32>
    %17 = vector.shape_cast %16 : vector<8xf32> to vector<8x1xf32>
    %18 = tpu.reciprocal %17 {approx = true} : vector<8x1xf32> -> vector<8x1xf32>
    %19 = vector.broadcast %18 : vector<8x1xf32> to vector<8x32xf32>
    %20 = arith.mulf %15, %19 : vector<8x32xf32>
    %21 = arith.mulf %0, %20 : vector<8x32xf32>
    %22 = arith.truncf %21 : vector<8x32xf32> to vector<8x32xbf16>
    %c0_8 = arith.constant 0 : index
    %c0_9 = arith.constant 0 : index
    %23 = vector.load %arg4[%c0_8, %c0_9] : memref<32x16xbf16, #tpu.memory_space<vmem>>, vector<32x16xbf16>
    %cst_10 = arith.constant dense<0.000000e+00> : vector<8x16xf32>
    %24 = tpu.matmul %22, %23, %cst_10 {dimension_numbers = #tpu.dot_dimension_numbers<[1], [0], [0], [1], [0, 0, 1, 1], [], []>} : vector<8x32xbf16>, vector<32x16xbf16>, vector<8x16xf32> -> vector<8x16xf32>
    %c0_11 = arith.constant 0 : index
    %c0_12 = arith.constant 0 : index
    %25 = vector.load %arg5[%c0_11, %c0_12] : memref<1x16xf32, #tpu.memory_space<vmem>>, vector<1x16xf32>
    %26 = vector.broadcast %25 : vector<1x16xf32> to vector<8x16xf32>
    %27 = arith.addf %24, %26 : vector<8x16xf32>
    %28 = tpu.concatenate %27, %6, %15, %20 in 1 : vector<8x16xf32>, vector<8x48xf32>, vector<8x32xf32>, vector<8x32xf32> -> vector<8x128xf32>
    %c0_13 = arith.constant 0 : index
    %c0_14 = arith.constant 0 : index
    %29 = vector.load %arg6[%c0_13, %c0_14] : memref<8x128xf32, #tpu.memory_space<vmem>>, vector<8x128xf32>
    tpu.vector_store %arg6[%c0_13, %c0_14], %28 {strides = array<i32>} : memref<8x128xf32, #tpu.memory_space<vmem>>, vector<8x128xf32>,
    return
  }
  func.func @transform_0(%arg0: i32) -> (i32, i32) {
    %c0_i32 = arith.constant 0 : i32
    %c0_i32_0 = arith.constant 0 : i32
    return %arg0, %c0_i32 : i32, i32
  }
  func.func @transform_1(%arg0: i32) -> (i32, i32) {
    %c0_i32 = arith.constant 0 : i32
    %c0_i32_0 = arith.constant 0 : i32
    %c0_i32_1 = arith.constant 0 : i32
    return %c0_i32, %c0_i32_0 : i32, i32
  }
  func.func @transform_2(%arg0: i32) -> (i32, i32) {
    %c0_i32 = arith.constant 0 : i32
    %c0_i32_0 = arith.constant 0 : i32
    %c0_i32_1 = arith.constant 0 : i32
    return %c0_i32, %c0_i32_0 : i32, i32
  }
  func.func @transform_3(%arg0: i32) -> (i32, i32) {
    %c0_i32 = arith.constant 0 : i32
    %c0_i32_0 = arith.constant 0 : i32
    %c0_i32_1 = arith.constant 0 : i32
    return %c0_i32, %c0_i32_0 : i32, i32
  }
  func.func @transform_4(%arg0: i32) -> (i32, i32) {
    %c0_i32 = arith.constant 0 : i32
    %c0_i32_0 = arith.constant 0 : i32
    %c0_i32_1 = arith.constant 0 : i32
    return %c0_i32, %c0_i32_0 : i32, i32
  }
  func.func @transform_5(%arg0: i32) -> (i32, i32) {
    %c0_i32 = arith.constant 0 : i32
    %c0_i32_0 = arith.constant 0 : i32
    return %arg0, %c0_i32 : i32, i32
  }
}

</mosaic_0001>

<llo_original>
// kernel: threenet_forward.1
$region0: #{threenet_forward.1}
  #allocation0 [shape = 'u32[]', space=smem, size = 0x4, offset = 0x4, fixed_abs, tag = 'smem constant byte address 0x4 - core index']
  #allocation1 [shape = 'u32[72,128]{1,0:T(1,128)}', space=vmem, size = 0x9000, scoped, tag = 'internal scratch']
  %s0 = inlined_call_operand.vmem [shape: f32[8,32], index: 0, kind: input, shape index: {}]
  %s1 = inlined_call_operand.vmem [shape: bf16[32,48], index: 1, kind: input, shape index: {}]
  %s2 = inlined_call_operand.vmem [shape: f32[1,48], index: 2, kind: input, shape index: {}]
  %s3 = inlined_call_operand.vmem [shape: bf16[32,16], index: 3, kind: input, shape index: {}]
  %s4 = inlined_call_operand.vmem [shape: f32[1,16], index: 4, kind: input, shape index: {}]
  %s5 = inlined_call_operand.vmem [shape: f32[8,128], index: 5, kind: output, shape index: {}]
  %s6 = sld [smem:[#allocation0]]
  $region30: #{threenet_forward.1} parent=0
    _
  %s8 = ssub.s32 1, %s6
  %s9 = scalar_select 0, %s8, %s6
  // Predicated region
  $region2: #{threenet_forward.1} parent=0 // pred_check
    _
  $region3: #{threenet_forward.1} parent=0 // pred_check_branch
    %11 = sbr.rel (0) target = $region5
  $region4: #{threenet_forward.1} parent=0 // pred_region
    _
  $region5: #{threenet_forward.1} parent=0 // pred_fallthru
    _
  // Predicated region
  $region6: #{threenet_forward.1} parent=0 // pred_check
    _
  $region7: #{threenet_forward.1} parent=0 // pred_check_branch
    %13 = sbr.rel (0) target = $region9
  $region8: #{threenet_forward.1} parent=0 // pred_region
    _
  $region9: #{threenet_forward.1} parent=0 // pred_fallthru
    _
  // Predicated region
  $region10: #{threenet_forward.1} parent=0 // pred_check
    _
  $region11: #{threenet_forward.1} parent=0 // pred_check_branch
    %15 = sbr.rel (0) target = $region13
  $region12: #{threenet_forward.1} parent=0 // pred_region
    _
  $region13: #{threenet_forward.1} parent=0 // pred_fallthru
    _
  // Predicated region
  $region14: #{threenet_forward.1} parent=0 // pred_check
    _
  $region15: #{threenet_forward.1} parent=0 // pred_check_branch
    %17 = sbr.rel (0) target = $region17
  $region16: #{threenet_forward.1} parent=0 // pred_region
    _
  $region17: #{threenet_forward.1} parent=0 // pred_fallthru
    _
  // Predicated region
  $region18: #{threenet_forward.1} parent=0 // pred_check
    _
  $region19: #{threenet_forward.1} parent=0 // pred_check_branch
    %19 = sbr.rel (0) target = $region21
  $region20: #{threenet_forward.1} parent=0 // pred_region
    _
  $region21: #{threenet_forward.1} parent=0 // pred_fallthru
    _
  %v21 = vld [vmem:[%s0] sm:$0xff]
  %v22 = vpack.c.bf16 %v21, %v21
  %v23 = vld [vmem:[%s1] sm:$0xf]
  %v24 = vld [vmem:[%s1 + $0x4] sm:$0xf]
  %v25 = vld [vmem:[%s1 + $0x8] sm:$0xf]
  %v26 = vld [vmem:[%s1 + $0xc] sm:$0xf]
  %v27 = vld [vmem:[%s2] sm:$0x1]
  %v29 = vperm.slane %v27, 0
  %v35 = vunpack.c.l.b16 %v23
  %v36 = vunpack.c.l.b16 %v24
  %v37 = vunpack.c.l.b16 %v25
  %v38 = vunpack.c.l.b16 %v26
  %v39 = vpack.c.b16 %v36, %v35
  %v40 = vpack.c.b16 %v38, %v37
  %vm43 = vcmask 261120
  %v45 = vsel %vm43, %v22, 0
  %47 = vmatpush.bf16.msra.mxu0 0
  %48 = vmatpush.bf16.msra.mxu0 0
  %49 = vmatpush.bf16.msra.mxu0 0
  %50 = vmatpush.bf16.msra.mxu0 0
  %51 = vmatpush.bf16.msra.mxu0 0
  %52 = vmatpush.bf16.msra.mxu0 0
  %53 = vmatpush.bf16.msra.mxu0 %v40
  %54 = vmatpush.bf16.msra.mxu0 %v39
  %55 = vmatmul.bf16.gmra.mxu0 %v45
  %v56 = vpop.f32.mrf.mxu0
  %v57 = vadd.f32 %v29, %v56
  %v58 = vpop.f32.mrf.mxu0
  %59 = vdwg.mxu0
  %v60 = vmax.f32 %v57, 0.0
  %v61 = vand.u32 2147483647, %v57
  %v62 = vsub.f32 0.0, %v61
  %v63 = vmul.f32 %v62, 1.442695
  %v64 = vpow.pop %v63
  %v65 = vadd.f32 %v64, 1.0
  %v66 = vlog2.pop %v65
  %v67 = vmul.f32 %v66, 0.6931472
  %v68 = vmul.f32 -0.5, %v64
  %v69 = vadd.f32 %v68, 1.0
  %v70 = vmul.f32 %v69, %v64
  %v71 = vand.u32 2147483647, %v64
  %vm72 = vcmp.lt.f32.partialorder %v71, 0.0004427343
  %v73 = vsel %vm72, %v70, %v67
  %v74 = vadd.f32 %v60, %v73
  %76 = vrot.lane.b32.xlu0 %v74, 112
  %v77 = vpop.permute.xlu0 %76
  %v79 = vsel %vm43, %v77, 0.0
  %80 = vadd.xlane.f32.xlu0 %v79
  %v81 = vpop.xlane.xlu0 %80
  %v82 = vrcp.pop %v81
  %v83 = vmul.f32 %v74, %v82
  %85 = vrot.lane.b32.xlu0 %v83, 112
  %v86 = vpop.permute.xlu0 %85
  %v88 = vmul.f32 %v21, %v86
  %v89 = vpack.c.bf16 %v88, %v88
  %v90 = vld [vmem:[%s3] sm:$0xf]
  %v91 = vld [vmem:[%s3 + $0x4] sm:$0xf]
  %v92 = vld [vmem:[%s3 + $0x8] sm:$0xf]
  %v93 = vld [vmem:[%s3 + $0xc] sm:$0xf]
  %v94 = vld [vmem:[%s4] sm:$0x1]
  %v96 = vperm.slane %v94, 0
  %v102 = vunpack.c.l.b16 %v90
  %v103 = vunpack.c.l.b16 %v91
  %v104 = vunpack.c.l.b16 %v92
  %v105 = vunpack.c.l.b16 %v93
  %v106 = vpack.c.b16 %v103, %v102
  %v107 = vpack.c.b16 %v105, %v104
  %v111 = vsel %vm43, %v89, 0
  %113 = vmatpush.bf16.msra.mxu0 0
  %114 = vmatpush.bf16.msra.mxu0 0
  %115 = vmatpush.bf16.msra.mxu0 0
  %116 = vmatpush.bf16.msra.mxu0 0
  %117 = vmatpush.bf16.msra.mxu0 0
  %118 = vmatpush.bf16.msra.mxu0 0
  %119 = vmatpush.bf16.msra.mxu0 %v107
  %120 = vmatpush.bf16.msra.mxu0 %v106
  %121 = vmatmul.bf16.gmra.mxu0 %v111
  %v122 = vpop.f32.mrf.mxu0
  %v123 = vadd.f32 %v96, %v122
  %v124 = vpop.f32.mrf.mxu0
  %125 = vdwg.mxu0
  %127 = vrot.lane.b32.xlu0 %v57, 16
  %v128 = vpop.permute.xlu0 %127
  %130 = vrot.lane.b32.xlu0 %v74, 48
  %v131 = vpop.permute.xlu0 %130
  %133 = vrot.lane.b32.xlu0 %v83, 80
  %v134 = vpop.permute.xlu0 %133
  %vm136 = vcmask 130048
  %v137 = vsel %vm136, %v123, %v128
  %vm138 = vcmask 523264
  %v139 = vsel %vm138, %v137, %v131
  %vm140 = vcmask 785408
  %v141 = vsel %vm140, %v139, %v134
  %142 = vst [vmem:[%s5] sm:$0xff] %v141
  // Predicated region
  $region22: #{threenet_forward.1} parent=0 // pred_check
    _
  $region23: #{threenet_forward.1} parent=0 // pred_check_branch
    %144 = sbr.rel (0) target = $region25
  $region24: #{threenet_forward.1} parent=0 // pred_region
    _
  $region25: #{threenet_forward.1} parent=0 // pred_fallthru
    _
  // Predicated region
  $region26: #{threenet_forward.1} parent=0 // pred_check
    _
  $region27: #{threenet_forward.1} parent=0 // pred_check_branch
    %146 = sbr.rel (0) target = $region29
  $region28: #{threenet_forward.1} parent=0 // pred_region
    _
  $region29: #{threenet_forward.1} parent=0 // pred_fallthru
    _

</llo_original>
